<compile_context>
chip_gen: v6e
topology: v6e:2x2x1
jax: 0.10.0
libtpu: 0.0.40
codegen_flags: <defaults>
</compile_context>

<pallas_src>
import functools

import jax
import jax.numpy as jnp
from jax.experimental import pallas as pl
from jax.experimental.pallas import tpu as pltpu


def _round_up(x, m):
    return (x + m - 1) // m * m


def _tpu_generation_and_vmem():
    """Best-effort (TPU generation, physical VMEM bytes per core)."""
    gen = 6
    try:
        kind = jax.devices()[0].device_kind.lower()
        for g in (7, 6, 5, 4, 3, 2):
            if ("v%d" % g) in kind or ("tpu%d" % g) in kind:
                gen = g
                break
    except Exception:
        pass
    cap = None
    try:
        info = pltpu.get_tpu_info()
        cap = getattr(info, "vmem_capacity_bytes", None)
    except Exception:
        cap = None
    if not cap:
        cap = (64 << 20) if gen >= 7 else (128 << 20)
    return gen, int(cap)


def gaussian_basis(d):
    # Standard "gaussian" RBF used with this module: phi(d) = exp(-d^2)
    return jnp.exp(-(d * d))


def _rbf_gaussian_kernel(x_ref, ct_ref, c2_ref, s2_ref, o_ref, *, exp_dtype):
    # x_ref : (TN, D)   input row tile
    # ct_ref: (D, TO)   -2 * centres^T tile
    # c2_ref: (1, TO)   ||c||^2
    # s2_ref: (1, TO)   sigma^2
    # o_ref : (TN, TO)  output tile
    x = x_ref[...]
    xf = x.astype(jnp.float32)
    x2 = jnp.sum(xf * xf, axis=-1, keepdims=True)                      # (TN, 1)
    xc = jnp.dot(x, ct_ref[...], preferred_element_type=jnp.float32)   # -2 x.c (MXU)
    d2 = jnp.maximum(x2 + c2_ref[...] + xc, 0.0)                       # ||x-c||^2
    # Fused gaussian: exp(-(||x-c|| * s)^2) == exp(-d2 * s^2)  (no sqrt)
    t = (-d2 * s2_ref[...]).astype(exp_dtype)
    o_ref[...] = jnp.exp(t).astype(o_ref.dtype)


def _rbf_generic_kernel(x_ref, ct_ref, c2_ref, s_ref, o_ref, *, basis_func):
    # Generic basis: d = sqrt(d2) * s, o = basis_func(d)
    x = x_ref[...]
    xf = x.astype(jnp.float32)
    x2 = jnp.sum(xf * xf, axis=-1, keepdims=True)
    xc = jnp.dot(x, ct_ref[...], preferred_element_type=jnp.float32)
    d2 = jnp.maximum(x2 + c2_ref[...] + xc, 0.0)
    d = jnp.sqrt(d2) * s_ref[...]
    o_ref[...] = basis_func(d).astype(o_ref.dtype)


def rbf_forward(x, centres, sigmas, basis_func=None, *, tile_n=None, tile_o=None):
    """Pallas RBF forward.

    x: (N, D), centres: (O, D), sigmas: (O,).
    basis_func=None (or gaussian_basis) uses the fused sqrt-free gaussian path.
    Returns (N, O) in x.dtype, matching the PyTorch module's forward.
    """
    N, D = x.shape
    O, D2 = centres.shape
    assert D == D2, "feature dims must match"
    out_dtype = x.dtype

    gen, vmem_cap = _tpu_generation_and_vmem()
    x_item = jnp.dtype(x.dtype).itemsize
    ct_item = jnp.dtype(centres.dtype).itemsize
    out_item = jnp.dtype(out_dtype).itemsize

    # ---- out_features (lane) tiling --------------------------------------
    if O <= 128:
        # Small O: keep output un-padded (full-dim last block); masked stores
        # are cheaper than writing + re-slicing 128/O x more HBM bytes.
        tile_o = o_pad = O
    else:
        o_pad = _round_up(O, 128)
        if tile_o is not None:
            tile_o = _round_up(int(tile_o), 128)
            o_pad = _round_up(O, tile_o)
        else:
            step = 256 if gen >= 6 else 128      # MXU: 2x256^2 (v6e/v7x) vs 4x128^2 (v5e)
            tile_o = 128
            for cand in (512, 384, 256, 128):
                if cand <= o_pad and cand % step == 0 and o_pad % cand == 0:
                    tile_o = cand
                    break
    o_grid = o_pad // tile_o

    # ---- row (batch) tiling: dtype-aware sublanes, VMEM-budget driven -----
    sub = max(8, 32 // x_item)                   # 8 rows f32, 16 bf16, 32 int8/fp8
    n_cap = _round_up(N, sub)
    if tile_n is None:
        budget = int(0.45 * vmem_cap)            # leave headroom for scratch
        const_bytes = 2 * (D * tile_o * ct_item + 2 * tile_o * 4)  # dbl-buffered consts
        row_bytes = 2 * D * x_item + 2 * tile_o * out_item         # dbl-buffered x + out
        tile_n = (budget - const_bytes - (1 << 20)) // row_bytes
        tile_n = int(max(sub, min(tile_n, 1024, n_cap)))
    tile_n = min(_round_up(int(tile_n), sub), n_cap)
    if gen >= 7 and o_grid == 1 and tile_n >= n_cap and n_cap >= 2 * sub:
        # v7x has 2 TensorCores: ensure a parallel axis has >= 2 steps.
        tile_n = _round_up(-(-N // 2), sub)
    n_pad = _round_up(N, tile_n)
    n_grid = n_pad // tile_n

    # ---- one-time wrapper-side prep (grid-invariant values) ---------------
    x_p = x if n_pad == N else jnp.pad(x, ((0, n_pad - N), (0, 0)))

    c32 = centres.astype(jnp.float32)
    # Fold the -2 of the expansion into the pre-transposed centres: saves one
    # VPU multiply over every (tile_n, tile_o) element in the kernel epilogue.
    ct = jnp.pad((-2.0 * centres).T, ((0, 0), (0, o_pad - O)))          # (D, Opad)
    c2 = jnp.pad(jnp.sum(c32 * c32, axis=-1)[None, :],
                 ((0, 0), (0, o_pad - O)))                               # (1, Opad)
    sig = sigmas.astype(jnp.float32)[None, :]

    use_gaussian = basis_func is None or basis_func is gaussian_basis
    if use_gaussian:
        # bf16 exp doubles EUP throughput on v6e/v7x; v5e EUP is f32-only.
        exp_dtype = (jnp.bfloat16
                     if (jnp.dtype(out_dtype) == jnp.bfloat16 and gen >= 6)
                     else jnp.float32)
        scale = jnp.pad(sig * sig, ((0, 0), (0, o_pad - O)))             # sigma^2
        kernel = functools.partial(_rbf_gaussian_kernel, exp_dtype=exp_dtype)
    else:
        # NOTE: padded lanes (only when O > 128) see d == 0; basis functions
        # singular at 0 produce inf/nan there, but those lanes are sliced off.
        scale = jnp.pad(sig, ((0, 0), (0, o_pad - O)))                   # sigma
        kernel = functools.partial(_rbf_generic_kernel, basis_func=basis_func)

    # ---- accurate VMEM estimate (no double counting), generation-aware cap
    est = (2 * tile_n * D * x_item                      # x tile (double-buffered)
           + 2 * tile_n * tile_o * out_item             # out tile (double-buffered)
           + 2 * (D * tile_o * ct_item + 2 * tile_o * 4))  # ct / c2 / scale
    vmem_limit = int(min(max(est + (4 << 20), 16 << 20), int(0.7 * vmem_cap)))

    cost = pl.CostEstimate(
        flops=int(2 * n_pad * o_pad * D),
        transcendentals=int(n_pad * o_pad),
        bytes_accessed=int(x_p.size * x_item + ct.size * ct_item
                           + (c2.size + scale.size) * 4
                           + n_pad * o_pad * out_item),
    )

    grid = (n_grid, o_grid)

    def _run(single_buffer_consts):
        const_mode = {}
        if single_buffer_consts:
            # ct/c2/scale are grid-invariant when o_grid == 1: single-buffer
            # them to reclaim VMEM for bigger row tiles.
            const_mode = dict(pipeline_mode=pl.Buffered(1))
        in_specs = [
            pl.BlockSpec((tile_n, D), lambda i, j: (i, 0)),              # x tile
            pl.BlockSpec((D, tile_o), lambda i, j: (0, j), **const_mode),  # -2*centres^T
            pl.BlockSpec((1, tile_o), lambda i, j: (0, j), **const_mode),  # ||c||^2
            pl.BlockSpec((1, tile_o), lambda i, j: (0, j), **const_mode),  # sigma^2 / sigma
        ]
        return pl.pallas_call(
            kernel,
            out_shape=jax.ShapeDtypeStruct((n_pad, o_pad), out_dtype),
            grid_spec=pl.GridSpec(
                grid=grid,
                in_specs=in_specs,
                out_specs=pl.BlockSpec((tile_n, tile_o), lambda i, j: (i, j)),
            ),
            compiler_params=pltpu.CompilerParams(
                dimension_semantics=("parallel", "parallel"),
                vmem_limit_bytes=vmem_limit,
            ),
            cost_estimate=cost,
        )(x_p, ct, c2, scale)

    if o_grid == 1 and hasattr(pl, "Buffered"):
        try:
            out_p = _run(True)
        except Exception:
            out_p = _run(False)   # fallback if pipeline_mode/Buffered(1) unsupported
    else:
        out_p = _run(False)

    if n_pad != N or o_pad != O:
        out_p = out_p[:N, :O]
    return out_p


def rbf_reference(x, centres, sigmas, basis_func=gaussian_basis):
    # Direct translation of the PyTorch forward (broadcasted diff).
    diff = x[:, None, :] - centres[None, :, :]
    d = jnp.sqrt(jnp.sum(diff * diff, axis=-1)) * sigmas[None, :]
    return basis_func(d)


if __name__ == "__main__":
    key = jax.random.PRNGKey(0)
    kx, kc, kx2, kc2 = jax.random.split(key, 4)

    # Module shapes: in_features=32, out_features=16, batch N=8.
    N, in_features, out_features = 8, 32, 16
    x = jax.random.normal(kx, (N, in_features), dtype=jnp.float32)
    # reset_parameters(): centres ~ Normal(0, 0.01), sigmas = 2.0
    centres = 0.01 * jax.random.normal(kc, (out_features, in_features),
                                       dtype=jnp.float32)
    sigmas = jnp.full((out_features,), 2.0, dtype=jnp.float32)

    out = jax.block_until_ready(rbf_forward(x, centres, sigmas))   # fused gaussian
    ref = rbf_reference(x, centres, sigmas)
    assert out.shape == (N, out_features)
    assert jnp.allclose(out, ref, atol=1e-5, rtol=1e-5), "gaussian mismatch"

    # Generic (non-gaussian) basis path: inverse quadratic.
    inv_quad = lambda d: 1.0 / (1.0 + d * d)
    out_g = jax.block_until_ready(rbf_forward(x, centres, sigmas, basis_func=inv_quad))
    ref_g = rbf_reference(x, centres, sigmas, basis_func=inv_quad)
    assert jnp.allclose(out_g, ref_g, atol=1e-5, rtol=1e-5), "generic mismatch"

    # Larger shape exercising row padding + out_features tiling.
    N2, D2, O2 = 200, 48, 384
    x2 = jax.random.normal(kx2, (N2, D2), dtype=jnp.float32)
    centres2 = jax.random.normal(kc2, (O2, D2), dtype=jnp.float32)
    sigmas2 = jnp.full((O2,), 0.1, dtype=jnp.float32)
    out2 = jax.block_until_ready(rbf_forward(x2, centres2, sigmas2))
    ref2 = rbf_reference(x2, centres2, sigmas2)
    assert out2.shape == (N2, O2)
    assert jnp.allclose(out2, ref2, atol=1e-4, rtol=1e-4), "tiled mismatch"

    print("KERNEL_OK")
</pallas_src>

<mosaic_0001>
module attributes {stable_mosaic.version = 11 : i64} {
  func.func @_rbf_gaussian_kernel(%arg0: i32, %arg1: i32, %arg2: memref<8x32xf32, #tpu.memory_space<vmem>>, %arg3: memref<32x16xf32, #tpu.memory_space<vmem>>, %arg4: memref<1x16xf32, #tpu.memory_space<vmem>>, %arg5: memref<1x16xf32, #tpu.memory_space<vmem>>, %arg6: memref<8x16xf32, #tpu.memory_space<vmem>>) attributes {dimension_semantics = [#tpu.dimension_semantics<parallel>, #tpu.dimension_semantics<parallel>], iteration_bounds = array<i64: 1, 1>, scalar_prefetch = 0 : i64, scratch_operands = 0 : i64, tpu.core_type = #tpu.core_type<tc>, window_params = [{transform_indices = @transform_0, window_bounds = array<i64: 8, 32>}, {pipeline_mode = #tpu.pipeline_mode<synchronous>, transform_indices = @transform_1, window_bounds = array<i64: 32, 16>}, {pipeline_mode = #tpu.pipeline_mode<synchronous>, transform_indices = @transform_2, window_bounds = array<i64: 1, 16>}, {pipeline_mode = #tpu.pipeline_mode<synchronous>, transform_indices = @transform_3, window_bounds = array<i64: 1, 16>}, {transform_indices = @transform_4, window_bounds = array<i64: 8, 16>}]} {
    %c0 = arith.constant 0 : index
    %c0_0 = arith.constant 0 : index
    %0 = vector.load %arg2[%c0, %c0_0] : memref<8x32xf32, #tpu.memory_space<vmem>>, vector<8x32xf32>
    %1 = arith.mulf %0, %0 : vector<8x32xf32>
    %cst = arith.constant dense<0.000000e+00> : vector<8xf32>
    %2 = vector.multi_reduction <add>, %1, %cst [1] : vector<8x32xf32> to vector<8xf32>
    %3 = vector.shape_cast %2 : vector<8xf32> to vector<8x1xf32>
    %c0_1 = arith.constant 0 : index
    %c0_2 = arith.constant 0 : index
    %4 = vector.load %arg3[%c0_1, %c0_2] : memref<32x16xf32, #tpu.memory_space<vmem>>, vector<32x16xf32>
    %cst_3 = arith.constant dense<0.000000e+00> : vector<8x16xf32>
    %5 = tpu.matmul %0, %4, %cst_3 {dimension_numbers = #tpu.dot_dimension_numbers<[1], [0], [0], [1], [0, 0, 1, 1], [], []>} : vector<8x32xf32>, vector<32x16xf32>, vector<8x16xf32> -> vector<8x16xf32>
    %c0_4 = arith.constant 0 : index
    %c0_5 = arith.constant 0 : index
    %6 = vector.load %arg4[%c0_4, %c0_5] : memref<1x16xf32, #tpu.memory_space<vmem>>, vector<1x16xf32>
    %7 = vector.broadcast %3 : vector<8x1xf32> to vector<8x16xf32>
    %8 = vector.broadcast %6 : vector<1x16xf32> to vector<8x16xf32>
    %9 = arith.addf %7, %8 : vector<8x16xf32>
    %10 = arith.addf %9, %5 : vector<8x16xf32>
    %cst_6 = arith.constant 0.000000e+00 : f32
    %11 = vector.broadcast %cst_6 : f32 to vector<8x16xf32>
    %12 = arith.maximumf %10, %11 : vector<8x16xf32>
    %cst_7 = arith.constant 0.000000e+00 : f32
    %13 = vector.broadcast %cst_7 : f32 to vector<8x16xf32>
    %14 = arith.subf %13, %12 : vector<8x16xf32>
    %c0_8 = arith.constant 0 : index
    %c0_9 = arith.constant 0 : index
    %15 = vector.load %arg5[%c0_8, %c0_9] : memref<1x16xf32, #tpu.memory_space<vmem>>, vector<1x16xf32>
    %16 = vector.broadcast %15 : vector<1x16xf32> to vector<8x16xf32>
    %17 = arith.mulf %14, %16 : vector<8x16xf32>
    %18 = math.exp %17 : vector<8x16xf32>
    %c0_10 = arith.constant 0 : index
    %c0_11 = arith.constant 0 : index
    %19 = vector.load %arg6[%c0_10, %c0_11] : memref<8x16xf32, #tpu.memory_space<vmem>>, vector<8x16xf32>
    tpu.vector_store %arg6[%c0_10, %c0_11], %18 {strides = array<i32>} : memref<8x16xf32, #tpu.memory_space<vmem>>, vector<8x16xf32>,
    return
  }
  func.func @transform_0(%arg0: i32, %arg1: i32) -> (i32, i32) {
    %c0_i32 = arith.constant 0 : i32
    %c0_i32_0 = arith.constant 0 : i32
    return %arg0, %c0_i32 : i32, i32
  }
  func.func @transform_1(%arg0: i32, %arg1: i32) -> (i32, i32) {
    %c0_i32 = arith.constant 0 : i32
    %c0_i32_0 = arith.constant 0 : i32
    return %c0_i32, %arg1 : i32, i32
  }
  func.func @transform_2(%arg0: i32, %arg1: i32) -> (i32, i32) {
    %c0_i32 = arith.constant 0 : i32
    %c0_i32_0 = arith.constant 0 : i32
    return %c0_i32, %arg1 : i32, i32
  }
  func.func @transform_3(%arg0: i32, %arg1: i32) -> (i32, i32) {
    %c0_i32 = arith.constant 0 : i32
    %c0_i32_0 = arith.constant 0 : i32
    return %c0_i32, %arg1 : i32, i32
  }
  func.func @transform_4(%arg0: i32, %arg1: i32) -> (i32, i32) {
    %c0_i32 = arith.constant 0 : i32
    return %arg0, %arg1 : i32, i32
  }
}

module attributes {stable_mosaic.version = 11 : i64} {
  func.func @_rbf_gaussian_kernel(%arg0: i32, %arg1: i32, %arg2: memref<8x32xf32, #tpu.memory_space<vmem>>, %arg3: memref<32x16xf32, #tpu.memory_space<vmem>>, %arg4: memref<1x16xf32, #tpu.memory_space<vmem>>, %arg5: memref<1x16xf32, #tpu.memory_space<vmem>>, %arg6: memref<8x16xf32, #tpu.memory_space<vmem>>) attributes {dimension_semantics = [#tpu.dimension_semantics<parallel>, #tpu.dimension_semantics<parallel>], iteration_bounds = array<i64: 1, 1>, scalar_prefetch = 0 : i64, scratch_operands = 0 : i64, tpu.core_type = #tpu.core_type<tc>, window_params = [{transform_indices = @transform_0, window_bounds = array<i64: 8, 32>}, {transform_indices = @transform_1, window_bounds = array<i64: 32, 16>}, {transform_indices = @transform_2, window_bounds = array<i64: 1, 16>}, {transform_indices = @transform_3, window_bounds = array<i64: 1, 16>}, {transform_indices = @transform_4, window_bounds = array<i64: 8, 16>}]} {
    %c0 = arith.constant 0 : index
    %c0_0 = arith.constant 0 : index
    %0 = vector.load %arg2[%c0, %c0_0] : memref<8x32xf32, #tpu.memory_space<vmem>>, vector<8x32xf32>
    %1 = arith.mulf %0, %0 : vector<8x32xf32>
    %cst = arith.constant dense<0.000000e+00> : vector<8xf32>
    %2 = vector.multi_reduction <add>, %1, %cst [1] : vector<8x32xf32> to vector<8xf32>
    %3 = vector.shape_cast %2 : vector<8xf32> to vector<8x1xf32>
    %c0_1 = arith.constant 0 : index
    %c0_2 = arith.constant 0 : index
    %4 = vector.load %arg3[%c0_1, %c0_2] : memref<32x16xf32, #tpu.memory_space<vmem>>, vector<32x16xf32>
    %cst_3 = arith.constant dense<0.000000e+00> : vector<8x16xf32>
    %5 = tpu.matmul %0, %4, %cst_3 {dimension_numbers = #tpu.dot_dimension_numbers<[1], [0], [0], [1], [0, 0, 1, 1], [], []>} : vector<8x32xf32>, vector<32x16xf32>, vector<8x16xf32> -> vector<8x16xf32>
    %c0_4 = arith.constant 0 : index
    %c0_5 = arith.constant 0 : index
    %6 = vector.load %arg4[%c0_4, %c0_5] : memref<1x16xf32, #tpu.memory_space<vmem>>, vector<1x16xf32>
    %7 = vector.broadcast %3 : vector<8x1xf32> to vector<8x16xf32>
    %8 = vector.broadcast %6 : vector<1x16xf32> to vector<8x16xf32>
    %9 = arith.addf %7, %8 : vector<8x16xf32>
    %10 = arith.addf %9, %5 : vector<8x16xf32>
    %cst_6 = arith.constant 0.000000e+00 : f32
    %11 = vector.broadcast %cst_6 : f32 to vector<8x16xf32>
    %12 = arith.maximumf %10, %11 : vector<8x16xf32>
    %cst_7 = arith.constant 0.000000e+00 : f32
    %13 = vector.broadcast %cst_7 : f32 to vector<8x16xf32>
    %14 = arith.subf %13, %12 : vector<8x16xf32>
    %c0_8 = arith.constant 0 : index
    %c0_9 = arith.constant 0 : index
    %15 = vector.load %arg5[%c0_8, %c0_9] : memref<1x16xf32, #tpu.memory_space<vmem>>, vector<1x16xf32>
    %16 = vector.broadcast %15 : vector<1x16xf32> to vector<8x16xf32>
    %17 = arith.mulf %14, %16 : vector<8x16xf32>
    %18 = math.exp %17 : vector<8x16xf32>
    %c0_10 = arith.constant 0 : index
    %c0_11 = arith.constant 0 : index
    %19 = vector.load %arg6[%c0_10, %c0_11] : memref<8x16xf32, #tpu.memory_space<vmem>>, vector<8x16xf32>
    tpu.vector_store %arg6[%c0_10, %c0_11], %18 {strides = array<i32>} : memref<8x16xf32, #tpu.memory_space<vmem>>, vector<8x16xf32>,
    return
  }
  func.func @transform_0(%arg0: i32, %arg1: i32) -> (i32, i32) {
    %c0_i32 = arith.constant 0 : i32
    %c0_i32_0 = arith.constant 0 : i32
    return %arg0, %c0_i32 : i32, i32
  }
  func.func @transform_1(%arg0: i32, %arg1: i32) -> (i32, i32) {
    %c0_i32 = arith.constant 0 : i32
    %c0_i32_0 = arith.constant 0 : i32
    return %c0_i32, %arg1 : i32, i32
  }
  func.func @transform_2(%arg0: i32, %arg1: i32) -> (i32, i32) {
    %c0_i32 = arith.constant 0 : i32
    %c0_i32_0 = arith.constant 0 : i32
    return %c0_i32, %arg1 : i32, i32
  }
  func.func @transform_3(%arg0: i32, %arg1: i32) -> (i32, i32) {
    %c0_i32 = arith.constant 0 : i32
    %c0_i32_0 = arith.constant 0 : i32
    return %c0_i32, %arg1 : i32, i32
  }
  func.func @transform_4(%arg0: i32, %arg1: i32) -> (i32, i32) {
    %c0_i32 = arith.constant 0 : i32
    return %arg0, %arg1 : i32, i32
  }
}

</mosaic_0001>

<llo_original>
// kernel: tpu_custom_call.1
$region0: #{tpu_custom_call.1}
  #allocation0 [shape = 'u32[]', space=smem, size = 0x4, offset = 0x4, fixed_abs, tag = 'smem constant byte address 0x4 - core index']
  #allocation1 [shape = 'u32[144,128]{1,0:T(1,128)}', space=vmem, size = 0x12000, scoped, tag = 'internal scratch']
  %s0 = inlined_call_operand.vmem [shape: f32[8,32], index: 0, kind: input, shape index: {}]
  %s1 = inlined_call_operand.vmem [shape: f32[32,16], index: 1, kind: input, shape index: {}]
  %s2 = inlined_call_operand.vmem [shape: f32[1,16], index: 2, kind: input, shape index: {}]
  %s3 = inlined_call_operand.vmem [shape: f32[1,16], index: 3, kind: input, shape index: {}]
  %s4 = inlined_call_operand.hbm [shape: f32[8,16], index: 4, kind: output, shape index: {}]
  %s5 = sld [smem:[#allocation0]]
  $region26: #{tpu_custom_call.1} parent=0
    _
  %s7 = ssub.s32 1, %s5
  %s8 = scalar_select 0, %s7, %s5
  $region1: #{tpu_custom_call.1} parent=0
    #allocation2 [shape = 'u8[4096]{0}', space=vmem, size = 0x1000, scoped, tag = 'output window, operand 0, single buffered']
    #allocation3 [shape = 's32[1]{0}', space=sflag, size = 0x4, scoped, tag = 'scoped memory for tpu_custom_call.1']
    %9 = vsyncpa [#allocation3], 0
    // Predicated region
    $region2: #{tpu_custom_call.1} parent=1 // pred_check
      _
    $region3: #{tpu_custom_call.1} parent=1 // pred_check_branch
      %11 = sbr.rel (0) target = $region5
    $region4: #{tpu_custom_call.1} parent=1 // pred_region
      _
    $region5: #{tpu_custom_call.1} parent=1 // pred_fallthru
      _
    // Predicated region
    $region6: #{tpu_custom_call.1} parent=1 // pred_check
      _
    $region7: #{tpu_custom_call.1} parent=1 // pred_check_branch
      %13 = sbr.rel (0) target = $region9
    $region8: #{tpu_custom_call.1} parent=1 // pred_region
      _
    $region9: #{tpu_custom_call.1} parent=1 // pred_fallthru
      _
    // Predicated region
    $region10: #{tpu_custom_call.1} parent=1 // pred_check
      _
    $region11: #{tpu_custom_call.1} parent=1 // pred_check_branch
      %15 = sbr.rel (0) target = $region13
    $region12: #{tpu_custom_call.1} parent=1 // pred_region
      _
    $region13: #{tpu_custom_call.1} parent=1 // pred_fallthru
      _
    // Predicated region
    $region14: #{tpu_custom_call.1} parent=1 // pred_check
      _
    $region15: #{tpu_custom_call.1} parent=1 // pred_check_branch
      %17 = sbr.rel (0) target = $region17
    $region16: #{tpu_custom_call.1} parent=1 // pred_region
      _
    $region17: #{tpu_custom_call.1} parent=1 // pred_fallthru
      _
    %v18 = vld [vmem:[%s0] sm:$0xff]
    %v19 = vmul.f32 %v18, %v18
    %vm20 = vcmask 261120
    %v21 = vsel %vm20, %v19, 0.0
    %22 = vadd.xlane.f32.xlu0 %v21
    %v23 = vpop.xlane.xlu0 %22
    %v24 = vld [vmem:[%s1] sm:$0xff]
    %v25 = vld [vmem:[%s1 + $0x8] sm:$0xff]
    %v26 = vld [vmem:[%s1 + $0x10] sm:$0xff]
    %v27 = vld [vmem:[%s1 + $0x18] sm:$0xff]
    %v29 = vsel %vm20, %v18, 0
    %31 = vmatprep.subr.mxu0 0.0
    %32 = vmatpush1.msra.mxu0 0.0
    %33 = vmatprep.subr.mxu0 0.0
    %34 = vmatpush1.msra.mxu0 0.0
    %35 = vmatprep.subr.mxu0 0.0
    %36 = vmatpush1.msra.mxu0 0.0
    %37 = vmatprep.subr.mxu0 0.0
    %38 = vmatpush1.msra.mxu0 0.0
    %39 = vmatprep.subr.mxu0 0.0
    %40 = vmatpush1.msra.mxu0 0.0
    %41 = vmatprep.subr.mxu0 0.0
    %42 = vmatpush1.msra.mxu0 0.0
    %43 = vmatprep.subr.mxu0 0.0
    %44 = vmatpush1.msra.mxu0 0.0
    %45 = vmatprep.subr.mxu0 0.0
    %46 = vmatpush1.msra.mxu0 0.0
    %47 = vmatprep.subr.mxu0 0.0
    %48 = vmatpush1.msra.mxu0 0.0
    %49 = vmatprep.subr.mxu0 0.0
    %50 = vmatpush1.msra.mxu0 0.0
    %51 = vmatprep.subr.mxu0 0.0
    %52 = vmatpush1.msra.mxu0 0.0
    %53 = vmatprep.subr.mxu0 0.0
    %54 = vmatpush1.msra.mxu0 0.0
    %55 = vmatprep.subr.mxu0 0.0
    %56 = vmatpush1.msra.mxu0 %v27
    %57 = vmatprep.subr.mxu0 0.0
    %58 = vmatpush1.msra.mxu0 %v26
    %59 = vmatprep.subr.mxu0 0.0
    %60 = vmatpush1.msra.mxu0 %v25
    %61 = vmatprep.subr.mxu0 0.0
    %62 = vmatpush1.msra.mxu0 %v24
    %63 = vmatprep.subr.mxu0 0.0
    %64 = vmatpush2.msra.mxu0 0.0
    %65 = vmatprep.subr.mxu0 0.0
    %66 = vmatpush2.msra.mxu0 0.0
    %67 = vmatprep.subr.mxu0 0.0
    %68 = vmatpush2.msra.mxu0 0.0
    %69 = vmatprep.subr.mxu0 0.0
    %70 = vmatpush2.msra.mxu0 0.0
    %71 = vmatprep.subr.mxu0 0.0
    %72 = vmatpush2.msra.mxu0 0.0
    %73 = vmatprep.subr.mxu0 0.0
    %74 = vmatpush2.msra.mxu0 0.0
    %75 = vmatprep.subr.mxu0 0.0
    %76 = vmatpush2.msra.mxu0 0.0
    %77 = vmatprep.subr.mxu0 0.0
    %78 = vmatpush2.msra.mxu0 0.0
    %79 = vmatprep.subr.mxu0 0.0
    %80 = vmatpush2.msra.mxu0 0.0
    %81 = vmatprep.subr.mxu0 0.0
    %82 = vmatpush2.msra.mxu0 0.0
    %83 = vmatprep.subr.mxu0 0.0
    %84 = vmatpush2.msra.mxu0 0.0
    %85 = vmatprep.subr.mxu0 0.0
    %86 = vmatpush2.msra.mxu0 0.0
    %87 = vmatprep.subr.mxu0 0.0
    %88 = vmatpush2.msra.mxu0 0.0
    %89 = vmatprep.subr.mxu0 0.0
    %90 = vmatpush2.msra.mxu0 0.0
    %91 = vmatprep.subr.mxu0 0.0
    %92 = vmatpush2.msra.mxu0 0.0
    %93 = vmatprep.subr.mxu0 0.0
    %94 = vmatpush2.msra.mxu0 0.0
    %95 = vmatprep.mubr.f32.mxu0 0.0
    %96 = vmatmul.mubr.f32.gmra.mxu0 %v29
    %v97 = vpop.f32.mrf.mxu0
    %v98 = vadd.f32 0.0, %v97
    %v99 = vpop.f32.mrf.mxu0
    %100 = vdwg.mxu0
    %v101 = vld [vmem:[%s2] sm:$0x1]
    %v103 = vlaneseq
    %v104 = vshrl.u32 %v103, 7
    %v105 = vsub.s32 0, %v104
    %v106 = vrot.slane %v101, %v105
    %v108 = vadd.f32 %v23, %v106
    %v109 = vadd.f32 %v108, %v98
    %v110 = vmax.f32 %v109, 0.0
    %v111 = vsub.f32 0.0, %v110
    %v112 = vld [vmem:[%s3] sm:$0x1]
    %v114 = vlaneseq
    %v115 = vshrl.u32 %v114, 7
    %v116 = vsub.s32 0, %v115
    %v117 = vrot.slane %v112, %v116
    %v119 = vmul.f32 %v111, %v117
    %v120 = vmul.f32 %v119, 1.442695
    %v121 = vpow.pop %v120
    %vm122 = vcmask 130048
    %123 = vst.msk [vmem:[#allocation2] sm:$0xff] %vm122, %v121
    // Predicated region
    $region18: #{tpu_custom_call.1} parent=1 // pred_check
      _
    $region19: #{tpu_custom_call.1} parent=1 // pred_check_branch
      %125 = sbr.rel (0) target = $region21
    $region20: #{tpu_custom_call.1} parent=1 // pred_region
      %s127 = ssub.s32 128, 128
      %128 = vsyncadd [#allocation3], %s127
      %s130 = sshll.u32 [#allocation2], 4
      %s131 = int_to_ptr.vmem [resolvable:$true] %s130
      %133 = dma.vmem_to_hbm [thread:$0]  %s131, 128, %s4, [#allocation3]
    $region21: #{tpu_custom_call.1} parent=1 // pred_fallthru
      _
    // Predicated region
    $region22: #{tpu_custom_call.1} parent=1 // pred_check
      _
    $region23: #{tpu_custom_call.1} parent=1 // pred_check_branch
      %135 = sbr.rel (0) target = $region25
    $region24: #{tpu_custom_call.1} parent=1 // pred_region
      %136 = dma.done [#allocation3], 128
    $region25: #{tpu_custom_call.1} parent=1 // pred_fallthru
      _
    %137 = vsyncpa [#allocation3], 1

// kernel: tpu_custom_call.1
$region0: #{tpu_custom_call.1}
  #allocation0 [shape = 'u32[]', space=smem, size = 0x4, offset = 0x4, fixed_abs, tag = 'smem constant byte address 0x4 - core index']
  #allocation1 [shape = 'u32[144,128]{1,0:T(1,128)}', space=vmem, size = 0x12000, scoped, tag = 'internal scratch']
  %s0 = inlined_call_operand.vmem [shape: f32[8,32], index: 0, kind: input, shape index: {}]
  %s1 = inlined_call_operand.vmem [shape: f32[32,16], index: 1, kind: input, shape index: {}]
  %s2 = inlined_call_operand.vmem [shape: f32[1,16], index: 2, kind: input, shape index: {}]
  %s3 = inlined_call_operand.vmem [shape: f32[1,16], index: 3, kind: input, shape index: {}]
  %s4 = inlined_call_operand.hbm [shape: f32[8,16], index: 4, kind: output, shape index: {}]
  %s5 = sld [smem:[#allocation0]]
  $region26: #{tpu_custom_call.1} parent=0
    _
  %s7 = ssub.s32 1, %s5
  %s8 = scalar_select 0, %s7, %s5
  $region1: #{tpu_custom_call.1} parent=0
    #allocation2 [shape = 'u8[4096]{0}', space=vmem, size = 0x1000, scoped, tag = 'output window, operand 0, single buffered']
    #allocation3 [shape = 's32[1]{0}', space=sflag, size = 0x4, scoped, tag = 'scoped memory for tpu_custom_call.1']
    %9 = vsyncpa [#allocation3], 0
    // Predicated region
    $region2: #{tpu_custom_call.1} parent=1 // pred_check
      _
    $region3: #{tpu_custom_call.1} parent=1 // pred_check_branch
      %11 = sbr.rel (0) target = $region5
    $region4: #{tpu_custom_call.1} parent=1 // pred_region
      _
    $region5: #{tpu_custom_call.1} parent=1 // pred_fallthru
      _
    // Predicated region
    $region6: #{tpu_custom_call.1} parent=1 // pred_check
      _
    $region7: #{tpu_custom_call.1} parent=1 // pred_check_branch
      %13 = sbr.rel (0) target = $region9
    $region8: #{tpu_custom_call.1} parent=1 // pred_region
      _
    $region9: #{tpu_custom_call.1} parent=1 // pred_fallthru
      _
    // Predicated region
    $region10: #{tpu_custom_call.1} parent=1 // pred_check
      _
    $region11: #{tpu_custom_call.1} parent=1 // pred_check_branch
      %15 = sbr.rel (0) target = $region13
    $region12: #{tpu_custom_call.1} parent=1 // pred_region
      _
    $region13: #{tpu_custom_call.1} parent=1 // pred_fallthru
      _
    // Predicated region
    $region14: #{tpu_custom_call.1} parent=1 // pred_check
      _
    $region15: #{tpu_custom_call.1} parent=1 // pred_check_branch
      %17 = sbr.rel (0) target = $region17
    $region16: #{tpu_custom_call.1} parent=1 // pred_region
      _
    $region17: #{tpu_custom_call.1} parent=1 // pred_fallthru
      _
    %v18 = vld [vmem:[%s0] sm:$0xff]
    %v19 = vmul.f32 %v18, %v18
    %vm20 = vcmask 261120
    %v21 = vsel %vm20, %v19, 0.0
    %22 = vadd.xlane.f32.xlu0 %v21
    %v23 = vpop.xlane.xlu0 %22
    %v24 = vld [vmem:[%s1] sm:$0xff]
    %v25 = vld [vmem:[%s1 + $0x8] sm:$0xff]
    %v26 = vld [vmem:[%s1 + $0x10] sm:$0xff]
    %v27 = vld [vmem:[%s1 + $0x18] sm:$0xff]
    %v29 = vsel %vm20, %v18, 0
    %31 = vmatprep.subr.mxu0 0.0
    %32 = vmatpush1.msra.mxu0 0.0
    %33 = vmatprep.subr.mxu0 0.0
    %34 = vmatpush1.msra.mxu0 0.0
    %35 = vmatprep.subr.mxu0 0.0
    %36 = vmatpush1.msra.mxu0 0.0
    %37 = vmatprep.subr.mxu0 0.0
    %38 = vmatpush1.msra.mxu0 0.0
    %39 = vmatprep.subr.mxu0 0.0
    %40 = vmatpush1.msra.mxu0 0.0
    %41 = vmatprep.subr.mxu0 0.0
    %42 = vmatpush1.msra.mxu0 0.0
    %43 = vmatprep.subr.mxu0 0.0
    %44 = vmatpush1.msra.mxu0 0.0
    %45 = vmatprep.subr.mxu0 0.0
    %46 = vmatpush1.msra.mxu0 0.0
    %47 = vmatprep.subr.mxu0 0.0
    %48 = vmatpush1.msra.mxu0 0.0
    %49 = vmatprep.subr.mxu0 0.0
    %50 = vmatpush1.msra.mxu0 0.0
    %51 = vmatprep.subr.mxu0 0.0
    %52 = vmatpush1.msra.mxu0 0.0
    %53 = vmatprep.subr.mxu0 0.0
    %54 = vmatpush1.msra.mxu0 0.0
    %55 = vmatprep.subr.mxu0 0.0
    %56 = vmatpush1.msra.mxu0 %v27
    %57 = vmatprep.subr.mxu0 0.0
    %58 = vmatpush1.msra.mxu0 %v26
    %59 = vmatprep.subr.mxu0 0.0
    %60 = vmatpush1.msra.mxu0 %v25
    %61 = vmatprep.subr.mxu0 0.0
    %62 = vmatpush1.msra.mxu0 %v24
    %63 = vmatprep.subr.mxu0 0.0
    %64 = vmatpush2.msra.mxu0 0.0
    %65 = vmatprep.subr.mxu0 0.0
    %66 = vmatpush2.msra.mxu0 0.0
    %67 = vmatprep.subr.mxu0 0.0
    %68 = vmatpush2.msra.mxu0 0.0
    %69 = vmatprep.subr.mxu0 0.0
    %70 = vmatpush2.msra.mxu0 0.0
    %71 = vmatprep.subr.mxu0 0.0
    %72 = vmatpush2.msra.mxu0 0.0
    %73 = vmatprep.subr.mxu0 0.0
    %74 = vmatpush2.msra.mxu0 0.0
    %75 = vmatprep.subr.mxu0 0.0
    %76 = vmatpush2.msra.mxu0 0.0
    %77 = vmatprep.subr.mxu0 0.0
    %78 = vmatpush2.msra.mxu0 0.0
    %79 = vmatprep.subr.mxu0 0.0
    %80 = vmatpush2.msra.mxu0 0.0
    %81 = vmatprep.subr.mxu0 0.0
    %82 = vmatpush2.msra.mxu0 0.0
    %83 = vmatprep.subr.mxu0 0.0
    %84 = vmatpush2.msra.mxu0 0.0
    %85 = vmatprep.subr.mxu0 0.0
    %86 = vmatpush2.msra.mxu0 0.0
    %87 = vmatprep.subr.mxu0 0.0
    %88 = vmatpush2.msra.mxu0 0.0
    %89 = vmatprep.subr.mxu0 0.0
    %90 = vmatpush2.msra.mxu0 0.0
    %91 = vmatprep.subr.mxu0 0.0
    %92 = vmatpush2.msra.mxu0 0.0
    %93 = vmatprep.subr.mxu0 0.0
    %94 = vmatpush2.msra.mxu0 0.0
    %95 = vmatprep.mubr.f32.mxu0 0.0
    %96 = vmatmul.mubr.f32.gmra.mxu0 %v29
    %v97 = vpop.f32.mrf.mxu0
    %v98 = vadd.f32 0.0, %v97
    %v99 = vpop.f32.mrf.mxu0
    %100 = vdwg.mxu0
    %v101 = vld [vmem:[%s2] sm:$0x1]
    %v103 = vlaneseq
    %v104 = vshrl.u32 %v103, 7
    %v105 = vsub.s32 0, %v104
    %v106 = vrot.slane %v101, %v105
    %v108 = vadd.f32 %v23, %v106
    %v109 = vadd.f32 %v108, %v98
    %v110 = vmax.f32 %v109, 0.0
    %v111 = vsub.f32 0.0, %v110
    %v112 = vld [vmem:[%s3] sm:$0x1]
    %v114 = vlaneseq
    %v115 = vshrl.u32 %v114, 7
    %v116 = vsub.s32 0, %v115
    %v117 = vrot.slane %v112, %v116
    %v119 = vmul.f32 %v111, %v117
    %v120 = vmul.f32 %v119, 1.442695
    %v121 = vpow.pop %v120
    %vm122 = vcmask 130048
    %123 = vst.msk [vmem:[#allocation2] sm:$0xff] %vm122, %v121
    // Predicated region
    $region18: #{tpu_custom_call.1} parent=1 // pred_check
      _
    $region19: #{tpu_custom_call.1} parent=1 // pred_check_branch
      %125 = sbr.rel (0) target = $region21
    $region20: #{tpu_custom_call.1} parent=1 // pred_region
      %s127 = ssub.s32 128, 128
      %128 = vsyncadd [#allocation3], %s127
      %s130 = sshll.u32 [#allocation2], 4
      %s131 = int_to_ptr.vmem [resolvable:$true] %s130
      %133 = dma.vmem_to_hbm [thread:$0]  %s131, 128, %s4, [#allocation3]
    $region21: #{tpu_custom_call.1} parent=1 // pred_fallthru
      _
    // Predicated region
    $region22: #{tpu_custom_call.1} parent=1 // pred_check
      _
    $region23: #{tpu_custom_call.1} parent=1 // pred_check_branch
      %135 = sbr.rel (0) target = $region25
    $region24: #{tpu_custom_call.1} parent=1 // pred_region
      %136 = dma.done [#allocation3], 128
    $region25: #{tpu_custom_call.1} parent=1 // pred_fallthru
      _
    %137 = vsyncpa [#allocation3], 1

</llo_original>
